<compile_context>
chip_gen: v5e
topology: v5e:2x2
jax: 0.10.0
libtpu: 0.0.40
codegen_flags: <defaults>
</compile_context>

<pallas_src>
import functools

import jax
import jax.numpy as jnp
import numpy as np
from jax.experimental import pallas as pl
from jax.experimental.pallas import tpu as pltpu


def _conv_gn_relu_kernel(x_ref, w_ref, gsel_ref, gselg_ref, beta_ref, o_ref, *,
                         K, Hout, inv_group_size, eps):
    # x_ref:     (1, Hp, Cin*W)          H-padded input, col = c*W + x'
    # w_ref:     (K, Cin*W, Cout*Wout)   banded Toeplitz conv weights (per ky)
    # gsel_ref:  (Cout*Wout, G)          one-hot column -> group selector
    # gselg_ref: (G, Cout*Wout)          group -> column broadcast, gamma folded
    # beta_ref:  (1, Cout*Wout)          GN beta, repeated over Wout
    # o_ref:     (1, Hout, Cout*Wout)    output, col = o*Wout + x
    xp = x_ref[0].astype(jnp.float32)                      # (Hp, Cin*W)

    # Conv2d as K MXU matmuls (kx & Cin sums folded into the Toeplitz weights;
    # H boundary handled by wrapper-side zero pad).
    acc = jnp.dot(xp[0:Hout, :], w_ref[0], preferred_element_type=jnp.float32)
    for ky in range(1, K):
        acc = acc + jnp.dot(xp[ky:ky + Hout, :], w_ref[ky],
                            preferred_element_type=jnp.float32)

    # GroupNorm (per-sample, biased variance).
    col_sum = jnp.sum(acc, axis=0, keepdims=True)          # (1, Cout*Wout)
    col_sq = jnp.sum(acc * acc, axis=0, keepdims=True)     # (1, Cout*Wout)
    g_sum = jnp.dot(col_sum, gsel_ref[...], preferred_element_type=jnp.float32)
    g_sq = jnp.dot(col_sq, gsel_ref[...], preferred_element_type=jnp.float32)
    mean = g_sum * inv_group_size                          # (1, G)
    var = g_sq * inv_group_size - mean * mean
    inv_std = jax.lax.rsqrt(var + eps)                     # (1, G)  (EUP)

    # Broadcast group stats back to columns; gamma is pre-folded into gselg:
    #   y = conv * (inv_std*gamma) + (beta - mean*inv_std*gamma)
    scale = jnp.dot(inv_std, gselg_ref[...],
                    preferred_element_type=jnp.float32)    # (1, Cout*Wout)
    shift = beta_ref[...] - jnp.dot(mean * inv_std, gselg_ref[...],
                                    preferred_element_type=jnp.float32)

    y = acc * scale + shift
    o_ref[0] = jnp.maximum(y, 0.0).astype(o_ref.dtype)     # ReLU


def conv_gn_relu(x, conv_w, gn_gamma, gn_beta, *, padding, num_groups=32,
                 eps=1e-5):
    """Conv_GN forward: Conv2d(K, stride=1, pad=padding, bias=False) -> GN -> ReLU.

    x: (N, Cin, H, W) f32; conv_w: (Cout, Cin, K, K); gn_gamma/gn_beta: (Cout,).
    Returns (N, Cout, Hout, Wout) f32.
    """
    N, Cin, H, W = x.shape
    Cout, Cin_w, K, K2 = conv_w.shape
    assert Cin_w == Cin and K == K2
    assert Cout % num_groups == 0
    P = int(padding)
    Hout = H + 2 * P - K + 1
    Wout = W + 2 * P - K + 1
    Hp = H + 2 * P
    G = num_groups
    Cg = Cout // G
    CW = Cout * Wout

    # ---- wrapper-side layout plumbing & constant prep (done once) ----
    # Input: pad H only, interleave channels along lanes: col = c*W + x'.
    xp = jnp.pad(x.astype(jnp.float32), ((0, 0), (0, 0), (P, P), (0, 0)))
    x_r = xp.transpose(0, 2, 1, 3).reshape(N, Hp, Cin * W)

    # Banded Toeplitz weights: T[ky, c*W + x', o*Wout + x] = w[o, c, ky, x'-x+P]
    # inside the band, 0 outside (this is the W-boundary zero padding).
    xo = jnp.arange(Wout)
    xi = jnp.arange(W)
    k_off = xi[:, None] - xo[None, :] + P                  # (W, Wout)
    valid = (k_off >= 0) & (k_off < K)
    k_idx = jnp.clip(k_off, 0, K - 1)
    wf = conv_w.astype(jnp.float32)
    wg = wf[:, :, :, k_idx]                                # (Cout, Cin, K, W, Wout)
    wg = jnp.where(valid[None, None, None], wg, 0.0)
    w_t = wg.transpose(2, 1, 3, 0, 4).reshape(K, Cin * W, CW)

    # GroupNorm helpers: column->group one-hot selector, group->column
    # broadcast matrix with gamma folded in, and lane-replicated beta.
    grp_of_col = jnp.repeat(jnp.arange(Cout), Wout) // Cg  # (Cout*Wout,)
    gsel = (grp_of_col[:, None] == jnp.arange(G)[None, :]).astype(jnp.float32)
    gamma_c = jnp.repeat(gn_gamma.astype(jnp.float32), Wout)  # (Cout*Wout,)
    gselg = gsel.T * gamma_c[None, :]                      # (G, Cout*Wout)
    beta_c = jnp.repeat(gn_beta.astype(jnp.float32), Wout)[None, :]

    kernel = functools.partial(
        _conv_gn_relu_kernel, K=K, Hout=Hout,
        inv_group_size=1.0 / float(Cg * Hout * Wout), eps=float(eps))

    cost = pl.CostEstimate(
        flops=int(2 * N * Hout * (K * Cin * W) * CW        # conv matmuls
                  + 2 * N * 4 * CW * G                     # GN reduce/broadcast
                  + 8 * N * Hout * CW),                    # GN epilogue + ReLU
        transcendentals=int(N * G),
        bytes_accessed=int(4 * (N * Hp * Cin * W + K * Cin * W * CW
                                + 2 * CW * G + CW + N * Hout * CW)))

    out_flat = pl.pallas_call(
        kernel,
        out_shape=jax.ShapeDtypeStruct((N, Hout, CW), jnp.float32),
        grid=(N,),
        in_specs=[
            pl.BlockSpec((1, Hp, Cin * W), lambda n: (n, 0, 0)),
            pl.BlockSpec((K, Cin * W, CW), lambda n: (0, 0, 0)),
            pl.BlockSpec((CW, G), lambda n: (0, 0)),
            pl.BlockSpec((G, CW), lambda n: (0, 0)),
            pl.BlockSpec((1, CW), lambda n: (0, 0)),
        ],
        out_specs=pl.BlockSpec((1, Hout, CW), lambda n: (n, 0, 0)),
        compiler_params=pltpu.CompilerParams(
            dimension_semantics=("parallel",)),
        cost_estimate=cost,
    )(x_r, w_t, gsel, gselg, beta_c)

    # (N, Hout, Cout*Wout) -> (N, Cout, Hout, Wout)
    return out_flat.reshape(N, Hout, Cout, Wout).transpose(0, 2, 1, 3)


def conv_gn_relu_ref(x, conv_w, gn_gamma, gn_beta, *, padding, num_groups=32,
                     eps=1e-5):
    """Pure-JAX reference matching the PyTorch Conv_GN forward."""
    conv = jax.lax.conv_general_dilated(
        x, conv_w, window_strides=(1, 1),
        padding=((padding, padding), (padding, padding)),
        dimension_numbers=("NCHW", "OIHW", "NCHW"),
        precision=jax.lax.Precision.HIGHEST)
    N, C, Ho, Wo = conv.shape
    g = conv.reshape(N, num_groups, (C // num_groups) * Ho * Wo)
    mean = jnp.mean(g, axis=2, keepdims=True)
    var = jnp.var(g, axis=2, keepdims=True)
    gn = ((g - mean) / jnp.sqrt(var + eps)).reshape(N, C, Ho, Wo)
    y = gn * gn_gamma.reshape(1, C, 1, 1) + gn_beta.reshape(1, C, 1, 1)
    return jnp.maximum(y, 0.0)


if __name__ == "__main__":
    key = jax.random.PRNGKey(0)
    k_x, k_w, k_g, k_b = jax.random.split(key, 4)

    # Small shapes consistent with Conv_GN: GroupNorm(32, Cout) => Cout % 32 == 0.
    N, Cin, H, W = 2, 4, 16, 16
    Cout, K, P = 32, 3, 1

    x = jax.random.normal(k_x, (N, Cin, H, W), jnp.float32)
    conv_w = jax.random.normal(k_w, (Cout, Cin, K, K), jnp.float32) * 0.1
    gn_gamma = 1.0 + 0.1 * jax.random.normal(k_g, (Cout,), jnp.float32)
    gn_beta = 0.1 * jax.random.normal(k_b, (Cout,), jnp.float32)

    out = jax.block_until_ready(
        conv_gn_relu(x, conv_w, gn_gamma, gn_beta, padding=P))
    ref = conv_gn_relu_ref(x, conv_w, gn_gamma, gn_beta, padding=P)
    np.testing.assert_allclose(np.asarray(out), np.asarray(ref),
                               atol=1e-3, rtol=1e-3)
    print("KERNEL_OK")
</pallas_src>

<mosaic_0001>
module attributes {stable_mosaic.version = 11 : i64} {
  func.func @_conv_gn_relu_kernel(%arg0: i32, %arg1: memref<1x18x64xf32, #tpu.memory_space<vmem>>, %arg2: memref<3x64x512xf32, #tpu.memory_space<vmem>>, %arg3: memref<512x32xf32, #tpu.memory_space<vmem>>, %arg4: memref<32x512xf32, #tpu.memory_space<vmem>>, %arg5: memref<1x512xf32, #tpu.memory_space<vmem>>, %arg6: memref<1x16x512xf32, #tpu.memory_space<vmem>>) attributes {dimension_semantics = [#tpu.dimension_semantics<parallel>], iteration_bounds = array<i64: 2>, scalar_prefetch = 0 : i64, scratch_operands = 0 : i64, tpu.core_type = #tpu.core_type<tc>, window_params = [{transform_indices = @transform_0, window_bounds = array<i64: 1, 18, 64>}, {pipeline_mode = #tpu.pipeline_mode<synchronous>, transform_indices = @transform_1, window_bounds = array<i64: 3, 64, 512>}, {pipeline_mode = #tpu.pipeline_mode<synchronous>, transform_indices = @transform_2, window_bounds = array<i64: 512, 32>}, {pipeline_mode = #tpu.pipeline_mode<synchronous>, transform_indices = @transform_3, window_bounds = array<i64: 32, 512>}, {pipeline_mode = #tpu.pipeline_mode<synchronous>, transform_indices = @transform_4, window_bounds = array<i64: 1, 512>}, {transform_indices = @transform_5, window_bounds = array<i64: 1, 16, 512>}]} {
    %c0 = arith.constant 0 : index
    %c0_0 = arith.constant 0 : index
    %c0_1 = arith.constant 0 : index
    %0 = vector.load %arg1[%c0, %c0_0, %c0_1] : memref<1x18x64xf32, #tpu.memory_space<vmem>>, vector<1x18x64xf32>
    %1 = vector.shape_cast %0 : vector<1x18x64xf32> to vector<18x64xf32>
    %2 = vector.extract_strided_slice %1 {offsets = [0, 0], sizes = [16, 64], strides = [1, 1]} : vector<18x64xf32> to vector<16x64xf32>
    %c0_2 = arith.constant 0 : index
    %c0_3 = arith.constant 0 : index
    %c0_4 = arith.constant 0 : index
    %3 = vector.load %arg2[%c0_2, %c0_3, %c0_4] : memref<3x64x512xf32, #tpu.memory_space<vmem>>, vector<1x64x512xf32>
    %4 = vector.shape_cast %3 : vector<1x64x512xf32> to vector<64x512xf32>
    %cst = arith.constant dense<0.000000e+00> : vector<16x512xf32>
    %5 = tpu.matmul %2, %4, %cst {dimension_numbers = #tpu.dot_dimension_numbers<[1], [0], [0], [1], [0, 0, 1, 1], [], []>} : vector<16x64xf32>, vector<64x512xf32>, vector<16x512xf32> -> vector<16x512xf32>
    %6 = vector.extract_strided_slice %1 {offsets = [1, 0], sizes = [16, 64], strides = [1, 1]} : vector<18x64xf32> to vector<16x64xf32>
    %c1 = arith.constant 1 : index
    %c0_5 = arith.constant 0 : index
    %c0_6 = arith.constant 0 : index
    %7 = vector.load %arg2[%c1, %c0_5, %c0_6] : memref<3x64x512xf32, #tpu.memory_space<vmem>>, vector<1x64x512xf32>
    %8 = vector.shape_cast %7 : vector<1x64x512xf32> to vector<64x512xf32>
    %cst_7 = arith.constant dense<0.000000e+00> : vector<16x512xf32>
    %9 = tpu.matmul %6, %8, %cst_7 {dimension_numbers = #tpu.dot_dimension_numbers<[1], [0], [0], [1], [0, 0, 1, 1], [], []>} : vector<16x64xf32>, vector<64x512xf32>, vector<16x512xf32> -> vector<16x512xf32>
    %10 = arith.addf %5, %9 : vector<16x512xf32>
    %11 = vector.extract_strided_slice %1 {offsets = [2, 0], sizes = [16, 64], strides = [1, 1]} : vector<18x64xf32> to vector<16x64xf32>
    %c2 = arith.constant 2 : index
    %c0_8 = arith.constant 0 : index
    %c0_9 = arith.constant 0 : index
    %12 = vector.load %arg2[%c2, %c0_8, %c0_9] : memref<3x64x512xf32, #tpu.memory_space<vmem>>, vector<1x64x512xf32>
    %13 = vector.shape_cast %12 : vector<1x64x512xf32> to vector<64x512xf32>
    %cst_10 = arith.constant dense<0.000000e+00> : vector<16x512xf32>
    %14 = tpu.matmul %11, %13, %cst_10 {dimension_numbers = #tpu.dot_dimension_numbers<[1], [0], [0], [1], [0, 0, 1, 1], [], []>} : vector<16x64xf32>, vector<64x512xf32>, vector<16x512xf32> -> vector<16x512xf32>
    %15 = arith.addf %10, %14 : vector<16x512xf32>
    %cst_11 = arith.constant dense<0.000000e+00> : vector<512xf32>
    %16 = vector.multi_reduction <add>, %15, %cst_11 [0] : vector<16x512xf32> to vector<512xf32>
    %17 = vector.shape_cast %16 : vector<512xf32> to vector<1x512xf32>
    %18 = arith.mulf %15, %15 : vector<16x512xf32>
    %cst_12 = arith.constant dense<0.000000e+00> : vector<512xf32>
    %19 = vector.multi_reduction <add>, %18, %cst_12 [0] : vector<16x512xf32> to vector<512xf32>
    %20 = vector.shape_cast %19 : vector<512xf32> to vector<1x512xf32>
    %c0_13 = arith.constant 0 : index
    %c0_14 = arith.constant 0 : index
    %21 = vector.load %arg3[%c0_13, %c0_14] : memref<512x32xf32, #tpu.memory_space<vmem>>, vector<512x32xf32>
    %cst_15 = arith.constant dense<0.000000e+00> : vector<1x32xf32>
    %22 = tpu.matmul %17, %21, %cst_15 {dimension_numbers = #tpu.dot_dimension_numbers<[1], [0], [0], [1], [0, 0, 1, 1], [], []>} : vector<1x512xf32>, vector<512x32xf32>, vector<1x32xf32> -> vector<1x32xf32>
    %c0_16 = arith.constant 0 : index
    %c0_17 = arith.constant 0 : index
    %23 = vector.load %arg3[%c0_16, %c0_17] : memref<512x32xf32, #tpu.memory_space<vmem>>, vector<512x32xf32>
    %cst_18 = arith.constant dense<0.000000e+00> : vector<1x32xf32>
    %24 = tpu.matmul %20, %23, %cst_18 {dimension_numbers = #tpu.dot_dimension_numbers<[1], [0], [0], [1], [0, 0, 1, 1], [], []>} : vector<1x512xf32>, vector<512x32xf32>, vector<1x32xf32> -> vector<1x32xf32>
    %cst_19 = arith.constant 3.906250e-03 : f32
    %25 = vector.broadcast %cst_19 : f32 to vector<1x32xf32>
    %26 = arith.mulf %22, %25 : vector<1x32xf32>
    %cst_20 = arith.constant 3.906250e-03 : f32
    %27 = vector.broadcast %cst_20 : f32 to vector<1x32xf32>
    %28 = arith.mulf %24, %27 : vector<1x32xf32>
    %29 = arith.mulf %26, %26 : vector<1x32xf32>
    %30 = arith.subf %28, %29 : vector<1x32xf32>
    %cst_21 = arith.constant 9.99999974E-6 : f32
    %31 = vector.broadcast %cst_21 : f32 to vector<1x32xf32>
    %32 = arith.addf %30, %31 : vector<1x32xf32>
    %33 = math.rsqrt %32 : vector<1x32xf32>
    %c0_22 = arith.constant 0 : index
    %c0_23 = arith.constant 0 : index
    %34 = vector.load %arg4[%c0_22, %c0_23] : memref<32x512xf32, #tpu.memory_space<vmem>>, vector<32x512xf32>
    %cst_24 = arith.constant dense<0.000000e+00> : vector<1x512xf32>
    %35 = tpu.matmul %33, %34, %cst_24 {dimension_numbers = #tpu.dot_dimension_numbers<[1], [0], [0], [1], [0, 0, 1, 1], [], []>} : vector<1x32xf32>, vector<32x512xf32>, vector<1x512xf32> -> vector<1x512xf32>
    %c0_25 = arith.constant 0 : index
    %c0_26 = arith.constant 0 : index
    %36 = vector.load %arg5[%c0_25, %c0_26] : memref<1x512xf32, #tpu.memory_space<vmem>>, vector<1x512xf32>
    %37 = arith.mulf %26, %33 : vector<1x32xf32>
    %c0_27 = arith.constant 0 : index
    %c0_28 = arith.constant 0 : index
    %38 = vector.load %arg4[%c0_27, %c0_28] : memref<32x512xf32, #tpu.memory_space<vmem>>, vector<32x512xf32>
    %cst_29 = arith.constant dense<0.000000e+00> : vector<1x512xf32>
    %39 = tpu.matmul %37, %38, %cst_29 {dimension_numbers = #tpu.dot_dimension_numbers<[1], [0], [0], [1], [0, 0, 1, 1], [], []>} : vector<1x32xf32>, vector<32x512xf32>, vector<1x512xf32> -> vector<1x512xf32>
    %40 = arith.subf %36, %39 : vector<1x512xf32>
    %41 = vector.broadcast %35 : vector<1x512xf32> to vector<16x512xf32>
    %42 = arith.mulf %15, %41 : vector<16x512xf32>
    %43 = vector.broadcast %40 : vector<1x512xf32> to vector<16x512xf32>
    %44 = arith.addf %42, %43 : vector<16x512xf32>
    %cst_30 = arith.constant 0.000000e+00 : f32
    %45 = vector.broadcast %cst_30 : f32 to vector<16x512xf32>
    %46 = arith.maximumf %44, %45 : vector<16x512xf32>
    %c0_31 = arith.constant 0 : index
    %c0_32 = arith.constant 0 : index
    %c0_33 = arith.constant 0 : index
    %47 = vector.load %arg6[%c0_31, %c0_32, %c0_33] : memref<1x16x512xf32, #tpu.memory_space<vmem>>, vector<1x16x512xf32>
    %48 = vector.shape_cast %47 : vector<1x16x512xf32> to vector<16x512xf32>
    %49 = vector.shape_cast %46 : vector<16x512xf32> to vector<1x16x512xf32>
    tpu.vector_store %arg6[%c0_31, %c0_32, %c0_33], %49 {strides = array<i32>} : memref<1x16x512xf32, #tpu.memory_space<vmem>>, vector<1x16x512xf32>,
    return
  }
  func.func @transform_0(%arg0: i32) -> (i32, i32, i32) {
    %c0_i32 = arith.constant 0 : i32
    %c0_i32_0 = arith.constant 0 : i32
    %c0_i32_1 = arith.constant 0 : i32
    return %arg0, %c0_i32, %c0_i32_0 : i32, i32, i32
  }
  func.func @transform_1(%arg0: i32) -> (i32, i32, i32) {
    %c0_i32 = arith.constant 0 : i32
    %c0_i32_0 = arith.constant 0 : i32
    %c0_i32_1 = arith.constant 0 : i32
    %c0_i32_2 = arith.constant 0 : i32
    return %c0_i32, %c0_i32_0, %c0_i32_1 : i32, i32, i32
  }
  func.func @transform_2(%arg0: i32) -> (i32, i32) {
    %c0_i32 = arith.constant 0 : i32
    %c0_i32_0 = arith.constant 0 : i32
    %c0_i32_1 = arith.constant 0 : i32
    return %c0_i32, %c0_i32_0 : i32, i32
  }
  func.func @transform_3(%arg0: i32) -> (i32, i32) {
    %c0_i32 = arith.constant 0 : i32
    %c0_i32_0 = arith.constant 0 : i32
    %c0_i32_1 = arith.constant 0 : i32
    return %c0_i32, %c0_i32_0 : i32, i32
  }
  func.func @transform_4(%arg0: i32) -> (i32, i32) {
    %c0_i32 = arith.constant 0 : i32
    %c0_i32_0 = arith.constant 0 : i32
    %c0_i32_1 = arith.constant 0 : i32
    return %c0_i32, %c0_i32_0 : i32, i32
  }
  func.func @transform_5(%arg0: i32) -> (i32, i32, i32) {
    %c0_i32 = arith.constant 0 : i32
    %c0_i32_0 = arith.constant 0 : i32
    %c0_i32_1 = arith.constant 0 : i32
    return %arg0, %c0_i32, %c0_i32_0 : i32, i32, i32
  }
}

</mosaic_0001>

<llo_original>
// kernel: tpu_custom_call.1
$region0: #{tpu_custom_call.1}
  #allocation0 [shape = 'u32[]', space=smem, size = 0x4, offset = 0x4, fixed_abs, tag = 'smem constant byte address 0x4 - core index']
  #allocation1 [shape = 'u32[72,128]{1,0:T(1,128)}', space=vmem, size = 0x9000, scoped, tag = 'internal scratch']
  %s0 = inlined_call_operand.vmem [shape: f32[2,18,64], index: 0, kind: input, shape index: {}]
  %s1 = inlined_call_operand.hbm [shape: f32[3,64,512], index: 1, kind: input, shape index: {}]
  %s2 = inlined_call_operand.vmem [shape: f32[512,32], index: 2, kind: input, shape index: {}]
  %s3 = inlined_call_operand.vmem [shape: f32[32,512], index: 3, kind: input, shape index: {}]
  %s4 = inlined_call_operand.vmem [shape: f32[1,512], index: 4, kind: input, shape index: {}]
  %s5 = inlined_call_operand.hbm [shape: f32[2,16,512], index: 5, kind: output, shape index: {}]
  %s6 = sld [smem:[#allocation0]]
  $region57: #{tpu_custom_call.1} parent=0
    _
  %s8 = ssub.s32 1, %s6
  %s9 = scalar_select 0, %s8, %s6
  $region1: #{tpu_custom_call.1} parent=0
    #allocation2 [shape = 'u8[393216]{0}', space=vmem, size = 0x60000, scoped, tag = 'input window, operand 1, single buffered']
    #allocation3 [shape = 's32[2]{0}', space=sflag, size = 0x8, scoped, tag = 'scoped memory for tpu_custom_call.1']
    #allocation4 [shape = 's32[2]{0}', space=sflag, size = 0x8, scoped, tag = 'scoped memory for tpu_custom_call.1']
    #allocation5 [shape = 'u8[65536]{0}', space=vmem, size = 0x10000, scoped, tag = 'output window, operand 0']
    %10 = vsyncpa [#allocation3], 0
    %11 = vsyncpa [#allocation4], 0
    %s12 = scalar_lea.sflag [#allocation4], 1
    %13 = vsyncpa %s12, 0
    loop: start=0, step=1, limit=4
    $region2: #{tpu_custom_call.1} parent=1 // loop_pre_header
      _
    $region3: #{tpu_custom_call.1} parent=1 // loop_header
      %s15 = sphi 0, %s19
      %p16 = scmp.ge.s32.totalorder %s15, 4
      %s25 = sphi 0, %s27
      %s28 = sphi 0, %s25
      %s29 = sphi 0, %s28
      %s45 = sphi 0, %s29
      %s49 = sphi 0, %s49
      %s51 = sphi 0, %s49
      %s52 = sphi 0, %s51
      %s66 = sphi 0, %s52
      %s70 = sphi 0, %s70
      %s72 = sphi 0, %s70
      %s73 = sphi 0, %s72
      %s87 = sphi 0, %s73
      %s91 = sphi 0, %s91
      %s93 = sphi 0, %s91
      %s94 = sphi 0, %s93
      %s108 = sphi 0, %s94
      %s112 = sphi 0, %s112
      %s114 = sphi 0, %s112
      %s115 = sphi 0, %s114
      %s129 = sphi 0, %s115
      %s135 = sphi 0, %s137
      %s138 = sphi 0, %s135
      %s139 = sphi 0, %s138
      %s155 = sphi 0, %s139
    $region4: #{tpu_custom_call.1} parent=1 // loop_header_branch
      %18 = sbr.rel (%p16) target = $region8
    $region5: #{tpu_custom_call.1} parent=1 // loop_body
      %s20 = ssub.s32 %s15, 1
      %s21 = ssub.s32 %s15, 2
      %s22 = sadd.s32 %s15, 1
      %s23 = ssub.s32 %s15, %s22
      %p24 = scmp.eq.s32.totalorder %s23, 0
      %s26 = sadd.s32 %s25, 1
      %s27 = scalar_select %p24, %s25, %s26
      %p30 = pneg %p24
      %p31 = scmp.eq.s32.totalorder %s15, 1
      %p32 = por %p30, %p31
      %p33 = scmp.ne.s32.totalorder %s25, %s28
      %p34 = scmp.eq.s32.totalorder %s15, 0
      %p35 = por %p33, %p34
      %p36 = scmp.ne.s32.totalorder %s25, %s28
      %p37 = scmp.eq.s32.totalorder %s20, 1
      %p38 = por %p36, %p37
      %p39 = scmp.ne.s32.totalorder %s28, %s29
      %p40 = scmp.eq.s32.totalorder %s20, 0
      %p41 = por %p39, %p40
      %p42 = scmp.ne.s32.totalorder %s28, %s29
      %p43 = scmp.eq.s32.totalorder %s21, 1
      %p44 = por %p42, %p43
      %p46 = scmp.ne.s32.totalorder %s29, %s45
      %p47 = scmp.eq.s32.totalorder %s21, 0
      %p48 = por %p46, %p47
      %s50 = sadd.s32 %s49, 1
      %p53 = scmp.eq.s32.totalorder %s15, 1
      %p54 = scmp.ne.s32.totalorder %s49, %s51
      %p55 = scmp.eq.s32.totalorder %s15, 0
      %p56 = por %p54, %p55
      %p57 = scmp.ne.s32.totalorder %s49, %s51
      %p58 = scmp.eq.s32.totalorder %s20, 1
      %p59 = por %p57, %p58
      %p60 = scmp.ne.s32.totalorder %s51, %s52
      %p61 = scmp.eq.s32.totalorder %s20, 0
      %p62 = por %p60, %p61
      %p63 = scmp.ne.s32.totalorder %s51, %s52
      %p64 = scmp.eq.s32.totalorder %s21, 1
      %p65 = por %p63, %p64
      %p67 = scmp.ne.s32.totalorder %s52, %s66
      %p68 = scmp.eq.s32.totalorder %s21, 0
      %p69 = por %p67, %p68
      %s71 = sadd.s32 %s70, 1
      %p74 = scmp.eq.s32.totalorder %s15, 1
      %p75 = scmp.ne.s32.totalorder %s70, %s72
      %p76 = scmp.eq.s32.totalorder %s15, 0
      %p77 = por %p75, %p76
      %p78 = scmp.ne.s32.totalorder %s70, %s72
      %p79 = scmp.eq.s32.totalorder %s20, 1
      %p80 = por %p78, %p79
      %p81 = scmp.ne.s32.totalorder %s72, %s73
      %p82 = scmp.eq.s32.totalorder %s20, 0
      %p83 = por %p81, %p82
      %p84 = scmp.ne.s32.totalorder %s72, %s73
      %p85 = scmp.eq.s32.totalorder %s21, 1
      %p86 = por %p84, %p85
      %p88 = scmp.ne.s32.totalorder %s73, %s87
      %p89 = scmp.eq.s32.totalorder %s21, 0
      %p90 = por %p88, %p89
      %s92 = sadd.s32 %s91, 1
      %p95 = scmp.eq.s32.totalorder %s15, 1
      %p96 = scmp.ne.s32.totalorder %s91, %s93
      %p97 = scmp.eq.s32.totalorder %s15, 0
      %p98 = por %p96, %p97
      %p99 = scmp.ne.s32.totalorder %s91, %s93
      %p100 = scmp.eq.s32.totalorder %s20, 1
      %p101 = por %p99, %p100
      %p102 = scmp.ne.s32.totalorder %s93, %s94
      %p103 = scmp.eq.s32.totalorder %s20, 0
      %p104 = por %p102, %p103
      %p105 = scmp.ne.s32.totalorder %s93, %s94
      %p106 = scmp.eq.s32.totalorder %s21, 1
      %p107 = por %p105, %p106
      %p109 = scmp.ne.s32.totalorder %s94, %s108
      %p110 = scmp.eq.s32.totalorder %s21, 0
      %p111 = por %p109, %p110
      %s113 = sadd.s32 %s112, 1
      %p116 = scmp.eq.s32.totalorder %s15, 1
      %p117 = scmp.ne.s32.totalorder %s112, %s114
      %p118 = scmp.eq.s32.totalorder %s15, 0
      %p119 = por %p117, %p118
      %p120 = scmp.ne.s32.totalorder %s112, %s114
      %p121 = scmp.eq.s32.totalorder %s20, 1
      %p122 = por %p120, %p121
      %p123 = scmp.ne.s32.totalorder %s114, %s115
      %p124 = scmp.eq.s32.totalorder %s20, 0
      %p125 = por %p123, %p124
      %p126 = scmp.ne.s32.totalorder %s114, %s115
      %p127 = scmp.eq.s32.totalorder %s21, 1
      %p128 = por %p126, %p127
      %p130 = scmp.ne.s32.totalorder %s115, %s129
      %p131 = scmp.eq.s32.totalorder %s21, 0
      %p132 = por %p130, %p131
      %s133 = ssub.s32 %s15, %s22
      %p134 = scmp.eq.s32.totalorder %s133, 0
      %s136 = sadd.s32 %s135, 1
      %s137 = scalar_select %p134, %s135, %s136
      %p140 = pneg %p134
      %p141 = scmp.eq.s32.totalorder %s15, 1
      %p142 = por %p140, %p141
      %p143 = scmp.ne.s32.totalorder %s135, %s138
      %p144 = scmp.eq.s32.totalorder %s15, 0
      %p145 = por %p143, %p144
      %p146 = scmp.ne.s32.totalorder %s135, %s138
      %p147 = scmp.eq.s32.totalorder %s20, 1
      %p148 = por %p146, %p147
      %p149 = scmp.ne.s32.totalorder %s138, %s139
      %p150 = scmp.eq.s32.totalorder %s20, 0
      %p151 = por %p149, %p150
      %p152 = scmp.ne.s32.totalorder %s138, %s139
      %p153 = scmp.eq.s32.totalorder %s21, 1
      %p154 = por %p152, %p153
      %p156 = scmp.ne.s32.totalorder %s139, %s155
      %p157 = scmp.eq.s32.totalorder %s21, 0
      %p158 = por %p156, %p157
      %p159 = scmp.le.s32.totalorder 1, %s15
      %p160 = scmp.lt.s32.totalorder %s15, 3
      %p161 = pnand %p159, %p160
      %p162 = pneg %p161
      // Predicated region
      $region9: #{tpu_custom_call.1} parent=5 // pred_check
        _
      $region10: #{tpu_custom_call.1} parent=5 // pred_check_branch
        %164 = sbr.rel (%p161) target = $region12
      $region11: #{tpu_custom_call.1} parent=5 // pred_region
        %s165 = ssub.s32 %s15, 1
        // Predicated region
        $region13: #{tpu_custom_call.1} parent=11 // pred_check
          %p166 = pneg %p62
        $region14: #{tpu_custom_call.1} parent=11 // pred_check_branch
          %168 = sbr.rel (%p166) target = $region16
        $region15: #{tpu_custom_call.1} parent=11 // pred_region
          %170 = vsyncadd [#allocation3], 0
          %s171 = sshll.u32 %s1, 4
          %s172 = int_to_ptr.hbm [resolvable:$true] %s171
          %s173 = sshll.u32 [#allocation2], 4
          %s174 = int_to_ptr.vmem [resolvable:$true] %s173
          %179 = dma.hbm_to_vmem [thread:$0]  %s172, 12288, %s174, [#allocation3], 512, 512, 32
        $region16: #{tpu_custom_call.1} parent=11 // pred_fallthru
          _
        // Predicated region
        $region17: #{tpu_custom_call.1} parent=11 // pred_check
          %p180 = pneg %p83
        $region18: #{tpu_custom_call.1} parent=11 // pred_check_branch
          %182 = sbr.rel (%p180) target = $region20
        $region19: #{tpu_custom_call.1} parent=11 // pred_region
          _
        $region20: #{tpu_custom_call.1} parent=11 // pred_fallthru
          _
        // Predicated region
        $region21: #{tpu_custom_call.1} parent=11 // pred_check
          %p183 = pneg %p104
        $region22: #{tpu_custom_call.1} parent=11 // pred_check_branch
          %185 = sbr.rel (%p183) target = $region24
        $region23: #{tpu_custom_call.1} parent=11 // pred_region
          _
        $region24: #{tpu_custom_call.1} parent=11 // pred_fallthru
          _
        // Predicated region
        $region25: #{tpu_custom_call.1} parent=11 // pred_check
          %p186 = pneg %p125
        $region26: #{tpu_custom_call.1} parent=11 // pred_check_branch
          %188 = sbr.rel (%p186) target = $region28
        $region27: #{tpu_custom_call.1} parent=11 // pred_region
          _
        $region28: #{tpu_custom_call.1} parent=11 // pred_fallthru
          _
      $region12: #{tpu_custom_call.1} parent=5 // pred_fallthru
        _
      %p189 = scmp.lt.s32.totalorder %s15, 2
      // Predicated region
      $region29: #{tpu_custom_call.1} parent=5 // pred_check
        %p190 = pneg %p189
      $region30: #{tpu_custom_call.1} parent=5 // pred_check_branch
        %192 = sbr.rel (%p190) target = $region32
      $region31: #{tpu_custom_call.1} parent=5 // pred_region
        // Predicated region
        $region33: #{tpu_custom_call.1} parent=31 // pred_check
          %p193 = pneg %p35
        $region34: #{tpu_custom_call.1} parent=31 // pred_check_branch
          %195 = sbr.rel (%p193) target = $region36
        $region35: #{tpu_custom_call.1} parent=31 // pred_region
          %p196 = scmp.lt.s32.totalorder %s15, 1
          %s197 = scalar_select %p196, %s15, 1
          %s198 = smul.addr %s197, 3
          %s199 = smul.addr %s198, 8
          %s200 = scalar_lea.vmem %s0, %s199
        $region36: #{tpu_custom_call.1} parent=31 // pred_fallthru
          _
      $region32: #{tpu_custom_call.1} parent=5 // pred_fallthru
        _
      %p201 = scmp.le.s32.totalorder 1, %s15
      %p202 = scmp.lt.s32.totalorder %s15, 3
      %p203 = pnand %p201, %p202
      %p204 = pneg %p203
      // Predicated region
      $region37: #{tpu_custom_call.1} parent=5 // pred_check
        _
      $region38: #{tpu_custom_call.1} parent=5 // pred_check_branch
        %206 = sbr.rel (%p203) target = $region40
      $region39: #{tpu_custom_call.1} parent=5 // pred_region
        %s207 = ssub.s32 %s15, 1
        // Predicated region
        $region41: #{tpu_custom_call.1} parent=39 // pred_check
          %p208 = pneg %p62
        $region42: #{tpu_custom_call.1} parent=39 // pred_check_branch
          %210 = sbr.rel (%p208) target = $region44
        $region43: #{tpu_custom_call.1} parent=39 // pred_region
          %212 = dma.done [#allocation3], 12288
        $region44: #{tpu_custom_call.1} parent=39 // pred_fallthru
          _
        %p213 = scmp.lt.s32.totalorder %s20, 1
        %s214 = scalar_select %p213, %s20, 1
        %s215 = smul.addr %s214, 3
        %s216 = smul.addr %s215, 8
        %s217 = scalar_lea.vmem %s0, %s216
        %p218 = pneg %p41
        %p219 = pneg %p38
        %p220 = pneg %p62
        %p221 = pneg %p59
        %p222 = pneg %p83
        %p223 = pneg %p80
        %p224 = pneg %p104
        %p225 = pneg %p101
        %p226 = pneg %p125
        %p227 = pneg %p122
        %p228 = pneg %p151
        %p229 = pneg %p148
        %s230 = sand.u32 %s138, 1
        %s231 = scalar_lea.sflag [#allocation4], %s230
        %s232 = sand.u32 %s138, 1
        %s233 = smul.addr %s232, 64
        %s234 = scalar_lea.vmem [#allocation5], %s233
        %p235 = scmp.lt.s32.totalorder %s20, 1
        %s236 = scalar_select %p235, %s20, 1
        %s237 = smul.addr %s236, 3
        %s238 = smul.addr %s237, 8
        %s239 = scalar_lea.vmem %s0, %s238
        %v240 = vld [vmem:[%s239] sm:$0xff]
        %v241 = vld [vmem:[%s239 + $0x8] sm:$0xff]
        %v242 = vld [vmem:[%s239 + $0x10] sm:$0x3]
        %v243 = vld [vmem:[#allocation2] sm:$0xff]
        %v244 = vld [vmem:[#allocation2 + $0x8] sm:$0xff]
        %v245 = vld [vmem:[#allocation2 + $0x10] sm:$0xff]
        %v246 = vld [vmem:[#allocation2 + $0x18] sm:$0xff]
        %v247 = vld [vmem:[#allocation2 + $0x20] sm:$0xff]
        %v248 = vld [vmem:[#allocation2 + $0x28] sm:$0xff]
        %v249 = vld [vmem:[#allocation2 + $0x30] sm:$0xff]
        %v250 = vld [vmem:[#allocation2 + $0x38] sm:$0xff]
        %v251 = vld [vmem:[#allocation2 + $0x40] sm:$0xff]
        %v252 = vld [vmem:[#allocation2 + $0x48] sm:$0xff]
        %v253 = vld [vmem:[#allocation2 + $0x50] sm:$0xff]
        %v254 = vld [vmem:[#allocation2 + $0x58] sm:$0xff]
        %v255 = vld [vmem:[#allocation2 + $0x60] sm:$0xff]
        %v256 = vld [vmem:[#allocation2 + $0x68] sm:$0xff]
        %v257 = vld [vmem:[#allocation2 + $0x70] sm:$0xff]
        %v258 = vld [vmem:[#allocation2 + $0x78] sm:$0xff]
        %v259 = vld [vmem:[#allocation2 + $0x80] sm:$0xff]
        %v260 = vld [vmem:[#allocation2 + $0x88] sm:$0xff]
        %v261 = vld [vmem:[#allocation2 + $0x90] sm:$0xff]
        %v262 = vld [vmem:[#allocation2 + $0x98] sm:$0xff]
        %v263 = vld [vmem:[#allocation2 + $0xa0] sm:$0xff]
        %v264 = vld [vmem:[#allocation2 + $0xa8] sm:$0xff]
        %v265 = vld [vmem:[#allocation2 + $0xb0] sm:$0xff]
        %v266 = vld [vmem:[#allocation2 + $0xb8] sm:$0xff]
        %v267 = vld [vmem:[#allocation2 + $0xc0] sm:$0xff]
        %v268 = vld [vmem:[#allocation2 + $0xc8] sm:$0xff]
        %v269 = vld [vmem:[#allocation2 + $0xd0] sm:$0xff]
        %v270 = vld [vmem:[#allocation2 + $0xd8] sm:$0xff]
        %v271 = vld [vmem:[#allocation2 + $0xe0] sm:$0xff]
        %v272 = vld [vmem:[#allocation2 + $0xe8] sm:$0xff]
        %v273 = vld [vmem:[#allocation2 + $0xf0] sm:$0xff]
        %v274 = vld [vmem:[#allocation2 + $0xf8] sm:$0xff]
        %s275 = scalar_lea.vmem [#allocation2], 256
        %v276 = vld [vmem:[%s275] sm:$0xff]
        %v277 = vld [vmem:[%s275 + $0x8] sm:$0xff]
        %v278 = vld [vmem:[%s275 + $0x10] sm:$0xff]
        %v279 = vld [vmem:[%s275 + $0x18] sm:$0xff]
        %v280 = vld [vmem:[%s275 + $0x20] sm:$0xff]
        %v281 = vld [vmem:[%s275 + $0x28] sm:$0xff]
        %v282 = vld [vmem:[%s275 + $0x30] sm:$0xff]
        %v283 = vld [vmem:[%s275 + $0x38] sm:$0xff]
        %v284 = vld [vmem:[%s275 + $0x40] sm:$0xff]
        %v285 = vld [vmem:[%s275 + $0x48] sm:$0xff]
        %v286 = vld [vmem:[%s275 + $0x50] sm:$0xff]
        %v287 = vld [vmem:[%s275 + $0x58] sm:$0xff]
        %v288 = vld [vmem:[%s275 + $0x60] sm:$0xff]
        %v289 = vld [vmem:[%s275 + $0x68] sm:$0xff]
        %v290 = vld [vmem:[%s275 + $0x70] sm:$0xff]
        %v291 = vld [vmem:[%s275 + $0x78] sm:$0xff]
        %v292 = vld [vmem:[%s275 + $0x80] sm:$0xff]
        %v293 = vld [vmem:[%s275 + $0x88] sm:$0xff]
        %v294 = vld [vmem:[%s275 + $0x90] sm:$0xff]
        %v295 = vld [vmem:[%s275 + $0x98] sm:$0xff]
        %v296 = vld [vmem:[%s275 + $0xa0] sm:$0xff]
        %v297 = vld [vmem:[%s275 + $0xa8] sm:$0xff]
        %v298 = vld [vmem:[%s275 + $0xb0] sm:$0xff]
        %v299 = vld [vmem:[%s275 + $0xb8] sm:$0xff]
        %v300 = vld [vmem:[%s275 + $0xc0] sm:$0xff]
        %v301 = vld [vmem:[%s275 + $0xc8] sm:$0xff]
        %v302 = vld [vmem:[%s275 + $0xd0] sm:$0xff]
        %v303 = vld [vmem:[%s275 + $0xd8] sm:$0xff]
        %v304 = vld [vmem:[%s275 + $0xe0] sm:$0xff]
        %v305 = vld [vmem:[%s275 + $0xe8] sm:$0xff]
        %v306 = vld [vmem:[%s275 + $0xf0] sm:$0xff]
        %v307 = vld [vmem:[%s275 + $0xf8] sm:$0xff]
        %vm311 = vcmask 1046528
        %v312 = vrot.slane %v240, 1
        %v313 = vrot.slane %v241, 1
        %v314 = vsel %vm311, %v312, %v313
        %v315 = vrot.slane %v242, 1
        %v316 = vsel %vm311, %v313, %v315
        %vm317 = vcmask 523264
        %v318 = vsel %vm317, %v314, 0
        %v320 = vsel %vm317, %v316, 0
        %322 = vmatpush.msra.mxu0 0.0
        %323 = vmatpush.msra.mxu0 0.0
        %324 = vmatpush.msra.mxu0 0.0
        %325 = vmatpush.msra.mxu0 0.0
        %326 = vmatpush.msra.mxu0 0.0
        %327 = vmatpush.msra.mxu0 0.0
        %328 = vmatpush.msra.mxu0 0.0
        %329 = vmatpush.msra.mxu0 0.0
        %330 = vmatpush.msra.mxu0 %v304
        %331 = vmatpush.msra.mxu0 %v300
        %332 = vmatpush.msra.mxu0 %v296
        %333 = vmatpush.msra.mxu0 %v292
        %334 = vmatpush.msra.mxu0 %v288
        %335 = vmatpush.msra.mxu0 %v284
        %336 = vmatpush.msra.mxu0 %v280
        %337 = vmatpush.msra.mxu0 %v276
        %338 = vmatmul.f32.gmra.mxu0 %v318
        %v339 = vpop.f32.mrf.mxu0
        %v340 = vadd.f32 0.0, %v339
        %341 = vmatmul.f32.gmra.mxu0 %v320
        %v342 = vpop.f32.mrf.mxu0
        %v343 = vadd.f32 0.0, %v342
        %344 = vdwg.mxu0
        %345 = vmatpush.msra.mxu0 0.0
        %346 = vmatpush.msra.mxu0 0.0
        %347 = vmatpush.msra.mxu0 0.0
        %348 = vmatpush.msra.mxu0 0.0
        %349 = vmatpush.msra.mxu0 0.0
        %350 = vmatpush.msra.mxu0 0.0
        %351 = vmatpush.msra.mxu0 0.0
        %352 = vmatpush.msra.mxu0 0.0
        %353 = vmatpush.msra.mxu0 %v305
        %354 = vmatpush.msra.mxu0 %v301
        %355 = vmatpush.msra.mxu0 %v297
        %356 = vmatpush.msra.mxu0 %v293
        %357 = vmatpush.msra.mxu0 %v289
        %358 = vmatpush.msra.mxu0 %v285
        %359 = vmatpush.msra.mxu0 %v281
        %360 = vmatpush.msra.mxu0 %v277
        %361 = vmatmul.f32.gmra.mxu0 %v318
        %v362 = vpop.f32.mrf.mxu0
        %v363 = vadd.f32 0.0, %v362
        %364 = vmatmul.f32.gmra.mxu0 %v320
        %v365 = vpop.f32.mrf.mxu0
        %v366 = vadd.f32 0.0, %v365
        %367 = vdwg.mxu0
        %368 = vmatpush.msra.mxu0 0.0
        %369 = vmatpush.msra.mxu0 0.0
        %370 = vmatpush.msra.mxu0 0.0
        %371 = vmatpush.msra.mxu0 0.0
        %372 = vmatpush.msra.mxu0 0.0
        %373 = vmatpush.msra.mxu0 0.0
        %374 = vmatpush.msra.mxu0 0.0
        %375 = vmatpush.msra.mxu0 0.0
        %376 = vmatpush.msra.mxu0 %v306
        %377 = vmatpush.msra.mxu0 %v302
        %378 = vmatpush.msra.mxu0 %v298
        %379 = vmatpush.msra.mxu0 %v294
        %380 = vmatpush.msra.mxu0 %v290
        %381 = vmatpush.msra.mxu0 %v286
        %382 = vmatpush.msra.mxu0 %v282
        %383 = vmatpush.msra.mxu0 %v278
        %384 = vmatmul.f32.gmra.mxu0 %v318
        %v385 = vpop.f32.mrf.mxu0
        %v386 = vadd.f32 0.0, %v385
        %387 = vmatmul.f32.gmra.mxu0 %v320
        %v388 = vpop.f32.mrf.mxu0
        %v389 = vadd.f32 0.0, %v388
        %390 = vdwg.mxu0
        %391 = vmatpush.msra.mxu0 0.0
        %392 = vmatpush.msra.mxu0 0.0
        %393 = vmatpush.msra.mxu0 0.0
        %394 = vmatpush.msra.mxu0 0.0
        %395 = vmatpush.msra.mxu0 0.0
        %396 = vmatpush.msra.mxu0 0.0
        %397 = vmatpush.msra.mxu0 0.0
        %398 = vmatpush.msra.mxu0 0.0
        %399 = vmatpush.msra.mxu0 %v307
        %400 = vmatpush.msra.mxu0 %v303
        %401 = vmatpush.msra.mxu0 %v299
        %402 = vmatpush.msra.mxu0 %v295
        %403 = vmatpush.msra.mxu0 %v291
        %404 = vmatpush.msra.mxu0 %v287
        %405 = vmatpush.msra.mxu0 %v283
        %406 = vmatpush.msra.mxu0 %v279
        %407 = vmatmul.f32.gmra.mxu0 %v318
        %v408 = vpop.f32.mrf.mxu0
        %v409 = vadd.f32 0.0, %v408
        %410 = vmatmul.f32.gmra.mxu0 %v320
        %v411 = vpop.f32.mrf.mxu0
        %v412 = vadd.f32 0.0, %v411
        %413 = vdwg.mxu0
        %v414 = vsel %vm317, %v240, 0
        %v416 = vsel %vm317, %v241, 0
        %418 = vmatpush.msra.mxu0 0.0
        %419 = vmatpush.msra.mxu0 0.0
        %420 = vmatpush.msra.mxu0 0.0
        %421 = vmatpush.msra.mxu0 0.0
        %422 = vmatpush.msra.mxu0 0.0
        %423 = vmatpush.msra.mxu0 0.0
        %424 = vmatpush.msra.mxu0 0.0
        %425 = vmatpush.msra.mxu0 0.0
        %426 = vmatpush.msra.mxu0 %v271
        %427 = vmatpush.msra.mxu0 %v267
        %428 = vmatpush.msra.mxu0 %v263
        %429 = vmatpush.msra.mxu0 %v259
        %430 = vmatpush.msra.mxu0 %v255
        %431 = vmatpush.msra.mxu0 %v251
        %432 = vmatpush.msra.mxu0 %v247
        %433 = vmatpush.msra.mxu0 %v243
        %434 = vmatmul.f32.gmra.mxu0 %v414
        %v435 = vpop.f32.mrf.mxu0
        %v436 = vadd.f32 %v340, %v435
        %437 = vmatmul.f32.gmra.mxu0 %v416
        %v438 = vpop.f32.mrf.mxu0
        %v439 = vadd.f32 %v343, %v438
        %440 = vdwg.mxu0
        %441 = vmatpush.msra.mxu0 0.0
        %442 = vmatpush.msra.mxu0 0.0
        %443 = vmatpush.msra.mxu0 0.0
        %444 = vmatpush.msra.mxu0 0.0
        %445 = vmatpush.msra.mxu0 0.0
        %446 = vmatpush.msra.mxu0 0.0
        %447 = vmatpush.msra.mxu0 0.0
        %448 = vmatpush.msra.mxu0 0.0
        %449 = vmatpush.msra.mxu0 %v272
        %450 = vmatpush.msra.mxu0 %v268
        %451 = vmatpush.msra.mxu0 %v264
        %452 = vmatpush.msra.mxu0 %v260
        %453 = vmatpush.msra.mxu0 %v256
        %454 = vmatpush.msra.mxu0 %v252
        %455 = vmatpush.msra.mxu0 %v248
        %456 = vmatpush.msra.mxu0 %v244
        %457 = vmatmul.f32.gmra.mxu0 %v414
        %v458 = vpop.f32.mrf.mxu0
        %v459 = vadd.f32 %v363, %v458
        %460 = vmatmul.f32.gmra.mxu0 %v416
        %v461 = vpop.f32.mrf.mxu0
        %v462 = vadd.f32 %v366, %v461
        %463 = vdwg.mxu0
        %464 = vmatpush.msra.mxu0 0.0
        %465 = vmatpush.msra.mxu0 0.0
        %466 = vmatpush.msra.mxu0 0.0
        %467 = vmatpush.msra.mxu0 0.0
        %468 = vmatpush.msra.mxu0 0.0
        %469 = vmatpush.msra.mxu0 0.0
        %470 = vmatpush.msra.mxu0 0.0
        %471 = vmatpush.msra.mxu0 0.0
        %472 = vmatpush.msra.mxu0 %v273
        %473 = vmatpush.msra.mxu0 %v269
        %474 = vmatpush.msra.mxu0 %v265
        %475 = vmatpush.msra.mxu0 %v261
        %476 = vmatpush.msra.mxu0 %v257
        %477 = vmatpush.msra.mxu0 %v253
        %478 = vmatpush.msra.mxu0 %v249
        %479 = vmatpush.msra.mxu0 %v245
        %480 = vmatmul.f32.gmra.mxu0 %v414
        %v481 = vpop.f32.mrf.mxu0
        %v482 = vadd.f32 %v386, %v481
        %483 = vmatmul.f32.gmra.mxu0 %v416
        %v484 = vpop.f32.mrf.mxu0
        %v485 = vadd.f32 %v389, %v484
        %486 = vdwg.mxu0
        %487 = vmatpush.msra.mxu0 0.0
        %488 = vmatpush.msra.mxu0 0.0
        %489 = vmatpush.msra.mxu0 0.0
        %490 = vmatpush.msra.mxu0 0.0
        %491 = vmatpush.msra.mxu0 0.0
        %492 = vmatpush.msra.mxu0 0.0
        %493 = vmatpush.msra.mxu0 0.0
        %494 = vmatpush.msra.mxu0 0.0
        %495 = vmatpush.msra.mxu0 %v274
        %496 = vmatpush.msra.mxu0 %v270
        %497 = vmatpush.msra.mxu0 %v266
        %498 = vmatpush.msra.mxu0 %v262
        %499 = vmatpush.msra.mxu0 %v258
        %500 = vmatpush.msra.mxu0 %v254
        %501 = vmatpush.msra.mxu0 %v250
        %502 = vmatpush.msra.mxu0 %v246
        %503 = vmatmul.f32.gmra.mxu0 %v414
        %v504 = vpop.f32.mrf.mxu0
        %v505 = vadd.f32 %v409, %v504
        %506 = vmatmul.f32.gmra.mxu0 %v416
        %v507 = vpop.f32.mrf.mxu0
        %v508 = vadd.f32 %v412, %v507
        %509 = vdwg.mxu0
        %s510 = scalar_lea.vmem [#allocation2], 512
        %v511 = vld [vmem:[%s510] sm:$0xff]
        %v512 = vld [vmem:[%s510 + $0x8] sm:$0xff]
        %v513 = vld [vmem:[%s510 + $0x10] sm:$0xff]
        %v514 = vld [vmem:[%s510 + $0x18] sm:$0xff]
        %v515 = vld [vmem:[%s510 + $0x20] sm:$0xff]
        %v516 = vld [vmem:[%s510 + $0x28] sm:$0xff]
        %v517 = vld [vmem:[%s510 + $0x30] sm:$0xff]
        %v518 = vld [vmem:[%s510 + $0x38] sm:$0xff]
        %v519 = vld [vmem:[%s510 + $0x40] sm:$0xff]
        %v520 = vld [vmem:[%s510 + $0x48] sm:$0xff]
        %v521 = vld [vmem:[%s510 + $0x50] sm:$0xff]
        %v522 = vld [vmem:[%s510 + $0x58] sm:$0xff]
        %v523 = vld [vmem:[%s510 + $0x60] sm:$0xff]
        %v524 = vld [vmem:[%s510 + $0x68] sm:$0xff]
        %v525 = vld [vmem:[%s510 + $0x70] sm:$0xff]
        %v526 = vld [vmem:[%s510 + $0x78] sm:$0xff]
        %v527 = vld [vmem:[%s510 + $0x80] sm:$0xff]
        %v528 = vld [vmem:[%s510 + $0x88] sm:$0xff]
        %v529 = vld [vmem:[%s510 + $0x90] sm:$0xff]
        %v530 = vld [vmem:[%s510 + $0x98] sm:$0xff]
        %v531 = vld [vmem:[%s510 + $0xa0] sm:$0xff]
        %v532 = vld [vmem:[%s510 + $0xa8] sm:$0xff]
        %v533 = vld [vmem:[%s510 + $0xb0] sm:$0xff]
        %v534 = vld [vmem:[%s510 + $0xb8] sm:$0xff]
        %v535 = vld [vmem:[%s510 + $0xc0] sm:$0xff]
        %v536 = vld [vmem:[%s510 + $0xc8] sm:$0xff]
        %v537 = vld [vmem:[%s510 + $0xd0] sm:$0xff]
        %v538 = vld [vmem:[%s510 + $0xd8] sm:$0xff]
        %v539 = vld [vmem:[%s510 + $0xe0] sm:$0xff]
        %v540 = vld [vmem:[%s510 + $0xe8] sm:$0xff]
        %v541 = vld [vmem:[%s510 + $0xf0] sm:$0xff]
        %v542 = vld [vmem:[%s510 + $0xf8] sm:$0xff]
        %vm543 = vcmask 1045504
        %v544 = vrot.slane %v240, 2
        %v545 = vrot.slane %v241, 2
        %v546 = vsel %vm543, %v544, %v545
        %v547 = vrot.slane %v242, 2
        %v548 = vsel %vm543, %v545, %v547
        %v549 = vsel %vm317, %v546, 0
        %v551 = vsel %vm317, %v548, 0
        %553 = vmatpush.msra.mxu0 0.0
        %554 = vmatpush.msra.mxu0 0.0
        %555 = vmatpush.msra.mxu0 0.0
        %556 = vmatpush.msra.mxu0 0.0
        %557 = vmatpush.msra.mxu0 0.0
        %558 = vmatpush.msra.mxu0 0.0
        %559 = vmatpush.msra.mxu0 0.0
        %560 = vmatpush.msra.mxu0 0.0
        %561 = vmatpush.msra.mxu0 %v539
        %562 = vmatpush.msra.mxu0 %v535
        %563 = vmatpush.msra.mxu0 %v531
        %564 = vmatpush.msra.mxu0 %v527
        %565 = vmatpush.msra.mxu0 %v523
        %566 = vmatpush.msra.mxu0 %v519
        %567 = vmatpush.msra.mxu0 %v515
        %568 = vmatpush.msra.mxu0 %v511
        %569 = vmatmul.f32.gmra.mxu0 %v549
        %v570 = vpop.f32.mrf.mxu0
        %v571 = vadd.f32 0.0, %v570
        %572 = vmatmul.f32.gmra.mxu0 %v551
        %v573 = vpop.f32.mrf.mxu0
        %v574 = vadd.f32 0.0, %v573
        %575 = vdwg.mxu0
        %576 = vmatpush.msra.mxu0 0.0
        %577 = vmatpush.msra.mxu0 0.0
        %578 = vmatpush.msra.mxu0 0.0
        %579 = vmatpush.msra.mxu0 0.0
        %580 = vmatpush.msra.mxu0 0.0
        %581 = vmatpush.msra.mxu0 0.0
        %582 = vmatpush.msra.mxu0 0.0
        %583 = vmatpush.msra.mxu0 0.0
        %584 = vmatpush.msra.mxu0 %v540
        %585 = vmatpush.msra.mxu0 %v536
        %586 = vmatpush.msra.mxu0 %v532
        %587 = vmatpush.msra.mxu0 %v528
        %588 = vmatpush.msra.mxu0 %v524
        %589 = vmatpush.msra.mxu0 %v520
        %590 = vmatpush.msra.mxu0 %v516
        %591 = vmatpush.msra.mxu0 %v512
        %592 = vmatmul.f32.gmra.mxu0 %v549
        %v593 = vpop.f32.mrf.mxu0
        %v594 = vadd.f32 0.0, %v593
        %595 = vmatmul.f32.gmra.mxu0 %v551
        %v596 = vpop.f32.mrf.mxu0
        %v597 = vadd.f32 0.0, %v596
        %598 = vdwg.mxu0
        %599 = vmatpush.msra.mxu0 0.0
        %600 = vmatpush.msra.mxu0 0.0
        %601 = vmatpush.msra.mxu0 0.0
        %602 = vmatpush.msra.mxu0 0.0
        %603 = vmatpush.msra.mxu0 0.0
        %604 = vmatpush.msra.mxu0 0.0
        %605 = vmatpush.msra.mxu0 0.0
        %606 = vmatpush.msra.mxu0 0.0
        %607 = vmatpush.msra.mxu0 %v541
        %608 = vmatpush.msra.mxu0 %v537
        %609 = vmatpush.msra.mxu0 %v533
        %610 = vmatpush.msra.mxu0 %v529
        %611 = vmatpush.msra.mxu0 %v525
        %612 = vmatpush.msra.mxu0 %v521
        %613 = vmatpush.msra.mxu0 %v517
        %614 = vmatpush.msra.mxu0 %v513
        %615 = vmatmul.f32.gmra.mxu0 %v549
        %v616 = vpop.f32.mrf.mxu0
        %v617 = vadd.f32 0.0, %v616
        %618 = vmatmul.f32.gmra.mxu0 %v551
        %v619 = vpop.f32.mrf.mxu0
        %v620 = vadd.f32 0.0, %v619
        %621 = vdwg.mxu0
        %622 = vmatpush.msra.mxu0 0.0
        %623 = vmatpush.msra.mxu0 0.0
        %624 = vmatpush.msra.mxu0 0.0
        %625 = vmatpush.msra.mxu0 0.0
        %626 = vmatpush.msra.mxu0 0.0
        %627 = vmatpush.msra.mxu0 0.0
        %628 = vmatpush.msra.mxu0 0.0
        %629 = vmatpush.msra.mxu0 0.0
        %630 = vmatpush.msra.mxu0 %v542
        %631 = vmatpush.msra.mxu0 %v538
        %632 = vmatpush.msra.mxu0 %v534
        %633 = vmatpush.msra.mxu0 %v530
        %634 = vmatpush.msra.mxu0 %v526
        %635 = vmatpush.msra.mxu0 %v522
        %636 = vmatpush.msra.mxu0 %v518
        %637 = vmatpush.msra.mxu0 %v514
        %638 = vmatmul.f32.gmra.mxu0 %v549
        %v639 = vpop.f32.mrf.mxu0
        %v640 = vadd.f32 0.0, %v639
        %641 = vmatmul.f32.gmra.mxu0 %v551
        %v642 = vpop.f32.mrf.mxu0
        %v643 = vadd.f32 0.0, %v642
        %644 = vdwg.mxu0
        %v645 = vadd.f32 %v436, %v571
        %v646 = vadd.f32 %v459, %v594
        %v647 = vadd.f32 %v482, %v617
        %v648 = vadd.f32 %v505, %v640
        %v649 = vadd.f32 %v439, %v574
        %v650 = vadd.f32 %v462, %v597
        %v651 = vadd.f32 %v485, %v620
        %v652 = vadd.f32 %v508, %v643
        %v653 = vadd.f32 %v645, %v649
        %v654 = vrot.slane %v653, 4
        %v655 = vadd.f32 %v653, %v654
        %v656 = vrot.slane %v655, 2
        %v657 = vadd.f32 %v655, %v656
        %v658 = vrot.slane %v657, 1
        %v659 = vadd.f32 %v657, %v658
        %v660 = vadd.f32 %v646, %v650
        %v661 = vrot.slane %v660, 4
        %v662 = vadd.f32 %v660, %v661
        %v663 = vrot.slane %v662, 2
        %v664 = vadd.f32 %v662, %v663
        %v665 = vrot.slane %v664, 1
        %v666 = vadd.f32 %v664, %v665
        %v667 = vadd.f32 %v647, %v651
        %v668 = vrot.slane %v667, 4
        %v669 = vadd.f32 %v667, %v668
        %v670 = vrot.slane %v669, 2
        %v671 = vadd.f32 %v669, %v670
        %v672 = vrot.slane %v671, 1
        %v673 = vadd.f32 %v671, %v672
        %v674 = vadd.f32 %v648, %v652
        %v675 = vrot.slane %v674, 4
        %v676 = vadd.f32 %v674, %v675
        %v677 = vrot.slane %v676, 2
        %v678 = vadd.f32 %v676, %v677
        %v679 = vrot.slane %v678, 1
        %v680 = vadd.f32 %v678, %v679
        %v681 = vmul.f32 %v645, %v645
        %v682 = vmul.f32 %v646, %v646
        %v683 = vmul.f32 %v647, %v647
        %v684 = vmul.f32 %v648, %v648
        %v685 = vmul.f32 %v649, %v649
        %v686 = vmul.f32 %v650, %v650
        %v687 = vmul.f32 %v651, %v651
        %v688 = vmul.f32 %v652, %v652
        %v689 = vadd.f32 %v681, %v685
        %v690 = vrot.slane %v689, 4
        %v691 = vadd.f32 %v689, %v690
        %v692 = vrot.slane %v691, 2
        %v693 = vadd.f32 %v691, %v692
        %v694 = vrot.slane %v693, 1
        %v695 = vadd.f32 %v693, %v694
        %v696 = vadd.f32 %v682, %v686
        %v697 = vrot.slane %v696, 4
        %v698 = vadd.f32 %v696, %v697
        %v699 = vrot.slane %v698, 2
        %v700 = vadd.f32 %v698, %v699
        %v701 = vrot.slane %v700, 1
        %v702 = vadd.f32 %v700, %v701
        %v703 = vadd.f32 %v683, %v687
        %v704 = vrot.slane %v703, 4
        %v705 = vadd.f32 %v703, %v704
        %v706 = vrot.slane %v705, 2
        %v707 = vadd.f32 %v705, %v706
        %v708 = vrot.slane %v707, 1
        %v709 = vadd.f32 %v707, %v708
        %v710 = vadd.f32 %v684, %v688
        %v711 = vrot.slane %v710, 4
        %v712 = vadd.f32 %v710, %v711
        %v713 = vrot.slane %v712, 2
        %v714 = vadd.f32 %v712, %v713
        %v715 = vrot.slane %v714, 1
        %v716 = vadd.f32 %v714, %v715
        %v717 = vld [vmem:[%s2] sm:$0xff]
        %v718 = vld [vmem:[%s2 + $0x8] sm:$0xff]
        %v719 = vld [vmem:[%s2 + $0x10] sm:$0xff]
        %v720 = vld [vmem:[%s2 + $0x18] sm:$0xff]
        %v721 = vld [vmem:[%s2 + $0x20] sm:$0xff]
        %v722 = vld [vmem:[%s2 + $0x28] sm:$0xff]
        %v723 = vld [vmem:[%s2 + $0x30] sm:$0xff]
        %v724 = vld [vmem:[%s2 + $0x38] sm:$0xff]
        %v725 = vld [vmem:[%s2 + $0x40] sm:$0xff]
        %v726 = vld [vmem:[%s2 + $0x48] sm:$0xff]
        %v727 = vld [vmem:[%s2 + $0x50] sm:$0xff]
        %v728 = vld [vmem:[%s2 + $0x58] sm:$0xff]
        %v729 = vld [vmem:[%s2 + $0x60] sm:$0xff]
        %v730 = vld [vmem:[%s2 + $0x68] sm:$0xff]
        %v731 = vld [vmem:[%s2 + $0x70] sm:$0xff]
        %v732 = vld [vmem:[%s2 + $0x78] sm:$0xff]
        %v733 = vld [vmem:[%s2 + $0x80] sm:$0xff]
        %v734 = vld [vmem:[%s2 + $0x88] sm:$0xff]
        %v735 = vld [vmem:[%s2 + $0x90] sm:$0xff]
        %v736 = vld [vmem:[%s2 + $0x98] sm:$0xff]
        %v737 = vld [vmem:[%s2 + $0xa0] sm:$0xff]
        %v738 = vld [vmem:[%s2 + $0xa8] sm:$0xff]
        %v739 = vld [vmem:[%s2 + $0xb0] sm:$0xff]
        %v740 = vld [vmem:[%s2 + $0xb8] sm:$0xff]
        %v741 = vld [vmem:[%s2 + $0xc0] sm:$0xff]
        %v742 = vld [vmem:[%s2 + $0xc8] sm:$0xff]
        %v743 = vld [vmem:[%s2 + $0xd0] sm:$0xff]
        %v744 = vld [vmem:[%s2 + $0xd8] sm:$0xff]
        %v745 = vld [vmem:[%s2 + $0xe0] sm:$0xff]
        %v746 = vld [vmem:[%s2 + $0xe8] sm:$0xff]
        %v747 = vld [vmem:[%s2 + $0xf0] sm:$0xff]
        %v748 = vld [vmem:[%s2 + $0xf8] sm:$0xff]
        %v749 = vld [vmem:[%s2 + $0x100] sm:$0xff]
        %v750 = vld [vmem:[%s2 + $0x108] sm:$0xff]
        %v751 = vld [vmem:[%s2 + $0x110] sm:$0xff]
        %v752 = vld [vmem:[%s2 + $0x118] sm:$0xff]
        %v753 = vld [vmem:[%s2 + $0x120] sm:$0xff]
        %v754 = vld [vmem:[%s2 + $0x128] sm:$0xff]
        %v755 = vld [vmem:[%s2 + $0x130] sm:$0xff]
        %v756 = vld [vmem:[%s2 + $0x138] sm:$0xff]
        %v757 = vld [vmem:[%s2 + $0x140] sm:$0xff]
        %v758 = vld [vmem:[%s2 + $0x148] sm:$0xff]
        %v759 = vld [vmem:[%s2 + $0x150] sm:$0xff]
        %v760 = vld [vmem:[%s2 + $0x158] sm:$0xff]
        %v761 = vld [vmem:[%s2 + $0x160] sm:$0xff]
        %v762 = vld [vmem:[%s2 + $0x168] sm:$0xff]
        %v763 = vld [vmem:[%s2 + $0x170] sm:$0xff]
        %v764 = vld [vmem:[%s2 + $0x178] sm:$0xff]
        %v765 = vld [vmem:[%s2 + $0x180] sm:$0xff]
        %v766 = vld [vmem:[%s2 + $0x188] sm:$0xff]
        %v767 = vld [vmem:[%s2 + $0x190] sm:$0xff]
        %v768 = vld [vmem:[%s2 + $0x198] sm:$0xff]
        %v769 = vld [vmem:[%s2 + $0x1a0] sm:$0xff]
        %v770 = vld [vmem:[%s2 + $0x1a8] sm:$0xff]
        %v771 = vld [vmem:[%s2 + $0x1b0] sm:$0xff]
        %v772 = vld [vmem:[%s2 + $0x1b8] sm:$0xff]
        %v773 = vld [vmem:[%s2 + $0x1c0] sm:$0xff]
        %v774 = vld [vmem:[%s2 + $0x1c8] sm:$0xff]
        %v775 = vld [vmem:[%s2 + $0x1d0] sm:$0xff]
        %v776 = vld [vmem:[%s2 + $0x1d8] sm:$0xff]
        %v777 = vld [vmem:[%s2 + $0x1e0] sm:$0xff]
        %v778 = vld [vmem:[%s2 + $0x1e8] sm:$0xff]
        %v779 = vld [vmem:[%s2 + $0x1f0] sm:$0xff]
        %v780 = vld [vmem:[%s2 + $0x1f8] sm:$0xff]
        %781 = vmatpush.msra.mxu0 %v732
        %782 = vmatpush.msra.mxu0 %v731
        %783 = vmatpush.msra.mxu0 %v730
        %784 = vmatpush.msra.mxu0 %v729
        %785 = vmatpush.msra.mxu0 %v728
        %786 = vmatpush.msra.mxu0 %v727
        %787 = vmatpush.msra.mxu0 %v726
        %788 = vmatpush.msra.mxu0 %v725
        %789 = vmatpush.msra.mxu0 %v724
        %790 = vmatpush.msra.mxu0 %v723
        %791 = vmatpush.msra.mxu0 %v722
        %792 = vmatpush.msra.mxu0 %v721
        %793 = vmatpush.msra.mxu0 %v720
        %794 = vmatpush.msra.mxu0 %v719
        %795 = vmatpush.msra.mxu0 %v718
        %796 = vmatpush.msra.mxu0 %v717
        %797 = vmatmul.f32.gmra.mxu0 %v659
        %v798 = vpop.f32.mrf.mxu0
        %v799 = vadd.f32 0.0, %v798
        %800 = vdwg.mxu0
        %801 = vmatpush.msra.mxu0 %v748
        %802 = vmatpush.msra.mxu0 %v747
        %803 = vmatpush.msra.mxu0 %v746
        %804 = vmatpush.msra.mxu0 %v745
        %805 = vmatpush.msra.mxu0 %v744
        %806 = vmatpush.msra.mxu0 %v743
        %807 = vmatpush.msra.mxu0 %v742
        %808 = vmatpush.msra.mxu0 %v741
        %809 = vmatpush.msra.mxu0 %v740
        %810 = vmatpush.msra.mxu0 %v739
        %811 = vmatpush.msra.mxu0 %v738
        %812 = vmatpush.msra.mxu0 %v737
        %813 = vmatpush.msra.mxu0 %v736
        %814 = vmatpush.msra.mxu0 %v735
        %815 = vmatpush.msra.mxu0 %v734
        %816 = vmatpush.msra.mxu0 %v733
        %817 = vmatmul.f32.gmra.mxu0 %v666
        %v818 = vpop.f32.mrf.mxu0
        %v819 = vadd.f32 %v799, %v818
        %820 = vdwg.mxu0
        %821 = vmatpush.msra.mxu0 %v764
        %822 = vmatpush.msra.mxu0 %v763
        %823 = vmatpush.msra.mxu0 %v762
        %824 = vmatpush.msra.mxu0 %v761
        %825 = vmatpush.msra.mxu0 %v760
        %826 = vmatpush.msra.mxu0 %v759
        %827 = vmatpush.msra.mxu0 %v758
        %828 = vmatpush.msra.mxu0 %v757
        %829 = vmatpush.msra.mxu0 %v756
        %830 = vmatpush.msra.mxu0 %v755
        %831 = vmatpush.msra.mxu0 %v754
        %832 = vmatpush.msra.mxu0 %v753
        %833 = vmatpush.msra.mxu0 %v752
        %834 = vmatpush.msra.mxu0 %v751
        %835 = vmatpush.msra.mxu0 %v750
        %836 = vmatpush.msra.mxu0 %v749
        %837 = vmatmul.f32.gmra.mxu0 %v673
        %v838 = vpop.f32.mrf.mxu0
        %v839 = vadd.f32 %v819, %v838
        %840 = vdwg.mxu0
        %841 = vmatpush.msra.mxu0 %v780
        %842 = vmatpush.msra.mxu0 %v779
        %843 = vmatpush.msra.mxu0 %v778
        %844 = vmatpush.msra.mxu0 %v777
        %845 = vmatpush.msra.mxu0 %v776
        %846 = vmatpush.msra.mxu0 %v775
        %847 = vmatpush.msra.mxu0 %v774
        %848 = vmatpush.msra.mxu0 %v773
        %849 = vmatpush.msra.mxu0 %v772
        %850 = vmatpush.msra.mxu0 %v771
        %851 = vmatpush.msra.mxu0 %v770
        %852 = vmatpush.msra.mxu0 %v769
        %853 = vmatpush.msra.mxu0 %v768
        %854 = vmatpush.msra.mxu0 %v767
        %855 = vmatpush.msra.mxu0 %v766
        %856 = vmatpush.msra.mxu0 %v765
        %857 = vmatmul.f32.gmra.mxu0 %v680
        %v858 = vpop.f32.mrf.mxu0
        %v859 = vadd.f32 %v839, %v858
        %860 = vdwg.mxu0
        %861 = vmatpush.msra.mxu0 %v732
        %862 = vmatpush.msra.mxu0 %v731
        %863 = vmatpush.msra.mxu0 %v730
        %864 = vmatpush.msra.mxu0 %v729
        %865 = vmatpush.msra.mxu0 %v728
        %866 = vmatpush.msra.mxu0 %v727
        %867 = vmatpush.msra.mxu0 %v726
        %868 = vmatpush.msra.mxu0 %v725
        %869 = vmatpush.msra.mxu0 %v724
        %870 = vmatpush.msra.mxu0 %v723
        %871 = vmatpush.msra.mxu0 %v722
        %872 = vmatpush.msra.mxu0 %v721
        %873 = vmatpush.msra.mxu0 %v720
        %874 = vmatpush.msra.mxu0 %v719
        %875 = vmatpush.msra.mxu0 %v718
        %876 = vmatpush.msra.mxu0 %v717
        %877 = vmatmul.f32.gmra.mxu0 %v695
        %v878 = vpop.f32.mrf.mxu0
        %v879 = vadd.f32 0.0, %v878
        %880 = vdwg.mxu0
        %881 = vmatpush.msra.mxu0 %v748
        %882 = vmatpush.msra.mxu0 %v747
        %883 = vmatpush.msra.mxu0 %v746
        %884 = vmatpush.msra.mxu0 %v745
        %885 = vmatpush.msra.mxu0 %v744
        %886 = vmatpush.msra.mxu0 %v743
        %887 = vmatpush.msra.mxu0 %v742
        %888 = vmatpush.msra.mxu0 %v741
        %889 = vmatpush.msra.mxu0 %v740
        %890 = vmatpush.msra.mxu0 %v739
        %891 = vmatpush.msra.mxu0 %v738
        %892 = vmatpush.msra.mxu0 %v737
        %893 = vmatpush.msra.mxu0 %v736
        %894 = vmatpush.msra.mxu0 %v735
        %895 = vmatpush.msra.mxu0 %v734
        %896 = vmatpush.msra.mxu0 %v733
        %897 = vmatmul.f32.gmra.mxu0 %v702
        %v898 = vpop.f32.mrf.mxu0
        %v899 = vadd.f32 %v879, %v898
        %900 = vdwg.mxu0
        %901 = vmatpush.msra.mxu0 %v764
        %902 = vmatpush.msra.mxu0 %v763
        %903 = vmatpush.msra.mxu0 %v762
        %904 = vmatpush.msra.mxu0 %v761
        %905 = vmatpush.msra.mxu0 %v760
        %906 = vmatpush.msra.mxu0 %v759
        %907 = vmatpush.msra.mxu0 %v758
        %908 = vmatpush.msra.mxu0 %v757
        %909 = vmatpush.msra.mxu0 %v756
        %910 = vmatpush.msra.mxu0 %v755
        %911 = vmatpush.msra.mxu0 %v754
        %912 = vmatpush.msra.mxu0 %v753
        %913 = vmatpush.msra.mxu0 %v752
        %914 = vmatpush.msra.mxu0 %v751
        %915 = vmatpush.msra.mxu0 %v750
        %916 = vmatpush.msra.mxu0 %v749
        %917 = vmatmul.f32.gmra.mxu0 %v709
        %v918 = vpop.f32.mrf.mxu0
        %v919 = vadd.f32 %v899, %v918
        %920 = vdwg.mxu0
        %921 = vmatpush.msra.mxu0 %v780
        %922 = vmatpush.msra.mxu0 %v779
        %923 = vmatpush.msra.mxu0 %v778
        %924 = vmatpush.msra.mxu0 %v777
        %925 = vmatpush.msra.mxu0 %v776
        %926 = vmatpush.msra.mxu0 %v775
        %927 = vmatpush.msra.mxu0 %v774
        %928 = vmatpush.msra.mxu0 %v773
        %929 = vmatpush.msra.mxu0 %v772
        %930 = vmatpush.msra.mxu0 %v771
        %931 = vmatpush.msra.mxu0 %v770
        %932 = vmatpush.msra.mxu0 %v769
        %933 = vmatpush.msra.mxu0 %v768
        %934 = vmatpush.msra.mxu0 %v767
        %935 = vmatpush.msra.mxu0 %v766
        %936 = vmatpush.msra.mxu0 %v765
        %937 = vmatmul.f32.gmra.mxu0 %v716
        %v938 = vpop.f32.mrf.mxu0
        %v939 = vadd.f32 %v919, %v938
        %940 = vdwg.mxu0
        %v941 = vmul.f32 %v859, 0.00390625
        %v942 = vmul.f32 %v939, 0.00390625
        %v943 = vmul.f32 %v941, %v941
        %v944 = vsub.f32 %v942, %v943
        %v945 = vadd.f32 %v944, 1e-05
        %v946 = vrsqrt.pop %v945
        %v947 = vmul.f32 %v946, %v945
        %v948 = vmul.f32 %v947, %v946
        %v949 = vmul.f32 0.5, %v948
        %v950 = vsub.f32 1.5, %v949
        %v951 = vmul.f32 %v946, %v950
        %vm952 = vweird.f32 %v945
        %vm953 = vweird.f32 %v946
        %vm954 = vmor %vm952, %vm953
        %v955 = vsel %vm954, %v946, %v951
        %v956 = vld [vmem:[%s3] sm:$0xff]
        %v957 = vld [vmem:[%s3 + $0x8] sm:$0xff]
        %v958 = vld [vmem:[%s3 + $0x10] sm:$0xff]
        %v959 = vld [vmem:[%s3 + $0x18] sm:$0xff]
        %v960 = vld [vmem:[%s3 + $0x20] sm:$0xff]
        %v961 = vld [vmem:[%s3 + $0x28] sm:$0xff]
        %v962 = vld [vmem:[%s3 + $0x30] sm:$0xff]
        %v963 = vld [vmem:[%s3 + $0x38] sm:$0xff]
        %v964 = vld [vmem:[%s3 + $0x40] sm:$0xff]
        %v965 = vld [vmem:[%s3 + $0x48] sm:$0xff]
        %v966 = vld [vmem:[%s3 + $0x50] sm:$0xff]
        %v967 = vld [vmem:[%s3 + $0x58] sm:$0xff]
        %v968 = vld [vmem:[%s3 + $0x60] sm:$0xff]
        %v969 = vld [vmem:[%s3 + $0x68] sm:$0xff]
        %v970 = vld [vmem:[%s3 + $0x70] sm:$0xff]
        %v971 = vld [vmem:[%s3 + $0x78] sm:$0xff]
        %vm972 = vcmask 261120
        %v974 = vsel %vm972, %v955, 0
        %976 = vmatpush.msra.mxu0 0.0
        %977 = vmatpush.msra.mxu0 0.0
        %978 = vmatpush.msra.mxu0 0.0
        %979 = vmatpush.msra.mxu0 0.0
        %980 = vmatpush.msra.mxu0 0.0
        %981 = vmatpush.msra.mxu0 0.0
        %982 = vmatpush.msra.mxu0 0.0
        %983 = vmatpush.msra.mxu0 0.0
        %984 = vmatpush.msra.mxu0 0.0
        %985 = vmatpush.msra.mxu0 0.0
        %986 = vmatpush.msra.mxu0 0.0
        %987 = vmatpush.msra.mxu0 0.0
        %988 = vmatpush.msra.mxu0 %v968
        %989 = vmatpush.msra.mxu0 %v964
        %990 = vmatpush.msra.mxu0 %v960
        %991 = vmatpush.msra.mxu0 %v956
        %992 = vmatmul.f32.gmra.mxu0 %v974
        %v993 = vpop.f32.mrf.mxu0
        %v994 = vadd.f32 0.0, %v993
        %995 = vdwg.mxu0
        %996 = vmatpush.msra.mxu0 0.0
        %997 = vmatpush.msra.mxu0 0.0
        %998 = vmatpush.msra.mxu0 0.0
        %999 = vmatpush.msra.mxu0 0.0
        %1000 = vmatpush.msra.mxu0 0.0
        %1001 = vmatpush.msra.mxu0 0.0
        %1002 = vmatpush.msra.mxu0 0.0
        %1003 = vmatpush.msra.mxu0 0.0
        %1004 = vmatpush.msra.mxu0 0.0
        %1005 = vmatpush.msra.mxu0 0.0
        %1006 = vmatpush.msra.mxu0 0.0
        %1007 = vmatpush.msra.mxu0 0.0
        %1008 = vmatpush.msra.mxu0 %v969
        %1009 = vmatpush.msra.mxu0 %v965
        %1010 = vmatpush.msra.mxu0 %v961
        %1011 = vmatpush.msra.mxu0 %v957
        %1012 = vmatmul.f32.gmra.mxu0 %v974
        %v1013 = vpop.f32.mrf.mxu0
        %v1014 = vadd.f32 0.0, %v1013
        %1015 = vdwg.mxu0
        %1016 = vmatpush.msra.mxu0 0.0
        %1017 = vmatpush.msra.mxu0 0.0
        %1018 = vmatpush.msra.mxu0 0.0
        %1019 = vmatpush.msra.mxu0 0.0
        %1020 = vmatpush.msra.mxu0 0.0
        %1021 = vmatpush.msra.mxu0 0.0
        %1022 = vmatpush.msra.mxu0 0.0
        %1023 = vmatpush.msra.mxu0 0.0
        %1024 = vmatpush.msra.mxu0 0.0
        %1025 = vmatpush.msra.mxu0 0.0
        %1026 = vmatpush.msra.mxu0 0.0
        %1027 = vmatpush.msra.mxu0 0.0
        %1028 = vmatpush.msra.mxu0 %v970
        %1029 = vmatpush.msra.mxu0 %v966
        %1030 = vmatpush.msra.mxu0 %v962
        %1031 = vmatpush.msra.mxu0 %v958
        %1032 = vmatmul.f32.gmra.mxu0 %v974
        %v1033 = vpop.f32.mrf.mxu0
        %v1034 = vadd.f32 0.0, %v1033
        %1035 = vdwg.mxu0
        %1036 = vmatpush.msra.mxu0 0.0
        %1037 = vmatpush.msra.mxu0 0.0
        %1038 = vmatpush.msra.mxu0 0.0
        %1039 = vmatpush.msra.mxu0 0.0
        %1040 = vmatpush.msra.mxu0 0.0
        %1041 = vmatpush.msra.mxu0 0.0
        %1042 = vmatpush.msra.mxu0 0.0
        %1043 = vmatpush.msra.mxu0 0.0
        %1044 = vmatpush.msra.mxu0 0.0
        %1045 = vmatpush.msra.mxu0 0.0
        %1046 = vmatpush.msra.mxu0 0.0
        %1047 = vmatpush.msra.mxu0 0.0
        %1048 = vmatpush.msra.mxu0 %v971
        %1049 = vmatpush.msra.mxu0 %v967
        %1050 = vmatpush.msra.mxu0 %v963
        %1051 = vmatpush.msra.mxu0 %v959
        %1052 = vmatmul.f32.gmra.mxu0 %v974
        %v1053 = vpop.f32.mrf.mxu0
        %v1054 = vadd.f32 0.0, %v1053
        %1055 = vdwg.mxu0
        %v1056 = vld [vmem:[%s4] sm:$0xf]
        %v1057 = vmul.f32 %v941, %v955
        %v1059 = vsel %vm972, %v1057, 0
        %1061 = vmatpush.msra.mxu0 0.0
        %1062 = vmatpush.msra.mxu0 0.0
        %1063 = vmatpush.msra.mxu0 0.0
        %1064 = vmatpush.msra.mxu0 0.0
        %1065 = vmatpush.msra.mxu0 0.0
        %1066 = vmatpush.msra.mxu0 0.0
        %1067 = vmatpush.msra.mxu0 0.0
        %1068 = vmatpush.msra.mxu0 0.0
        %1069 = vmatpush.msra.mxu0 0.0
        %1070 = vmatpush.msra.mxu0 0.0
        %1071 = vmatpush.msra.mxu0 0.0
        %1072 = vmatpush.msra.mxu0 0.0
        %1073 = vmatpush.msra.mxu0 %v968
        %1074 = vmatpush.msra.mxu0 %v964
        %1075 = vmatpush.msra.mxu0 %v960
        %1076 = vmatpush.msra.mxu0 %v956
        %1077 = vmatmul.f32.gmra.mxu0 %v1059
        %v1078 = vpop.f32.mrf.mxu0
        %v1079 = vadd.f32 0.0, %v1078
        %1080 = vdwg.mxu0
        %1081 = vmatpush.msra.mxu0 0.0
        %1082 = vmatpush.msra.mxu0 0.0
        %1083 = vmatpush.msra.mxu0 0.0
        %1084 = vmatpush.msra.mxu0 0.0
        %1085 = vmatpush.msra.mxu0 0.0
        %1086 = vmatpush.msra.mxu0 0.0
        %1087 = vmatpush.msra.mxu0 0.0
        %1088 = vmatpush.msra.mxu0 0.0
        %1089 = vmatpush.msra.mxu0 0.0
        %1090 = vmatpush.msra.mxu0 0.0
        %1091 = vmatpush.msra.mxu0 0.0
        %1092 = vmatpush.msra.mxu0 0.0
        %1093 = vmatpush.msra.mxu0 %v969
        %1094 = vmatpush.msra.mxu0 %v965
        %1095 = vmatpush.msra.mxu0 %v961
        %1096 = vmatpush.msra.mxu0 %v957
        %1097 = vmatmul.f32.gmra.mxu0 %v1059
        %v1098 = vpop.f32.mrf.mxu0
        %v1099 = vadd.f32 0.0, %v1098
        %1100 = vdwg.mxu0
        %1101 = vmatpush.msra.mxu0 0.0
        %1102 = vmatpush.msra.mxu0 0.0
        %1103 = vmatpush.msra.mxu0 0.0
        %1104 = vmatpush.msra.mxu0 0.0
        %1105 = vmatpush.msra.mxu0 0.0
        %1106 = vmatpush.msra.mxu0 0.0
        %1107 = vmatpush.msra.mxu0 0.0
        %1108 = vmatpush.msra.mxu0 0.0
        %1109 = vmatpush.msra.mxu0 0.0
        %1110 = vmatpush.msra.mxu0 0.0
        %1111 = vmatpush.msra.mxu0 0.0
        %1112 = vmatpush.msra.mxu0 0.0
        %1113 = vmatpush.msra.mxu0 %v970
        %1114 = vmatpush.msra.mxu0 %v966
        %1115 = vmatpush.msra.mxu0 %v962
        %1116 = vmatpush.msra.mxu0 %v958
        %1117 = vmatmul.f32.gmra.mxu0 %v1059
        %v1118 = vpop.f32.mrf.mxu0
        %v1119 = vadd.f32 0.0, %v1118
        %1120 = vdwg.mxu0
        %1121 = vmatpush.msra.mxu0 0.0
        %1122 = vmatpush.msra.mxu0 0.0
        %1123 = vmatpush.msra.mxu0 0.0
        %1124 = vmatpush.msra.mxu0 0.0
        %1125 = vmatpush.msra.mxu0 0.0
        %1126 = vmatpush.msra.mxu0 0.0
        %1127 = vmatpush.msra.mxu0 0.0
        %1128 = vmatpush.msra.mxu0 0.0
        %1129 = vmatpush.msra.mxu0 0.0
        %1130 = vmatpush.msra.mxu0 0.0
        %1131 = vmatpush.msra.mxu0 0.0
        %1132 = vmatpush.msra.mxu0 0.0
        %1133 = vmatpush.msra.mxu0 %v971
        %1134 = vmatpush.msra.mxu0 %v967
        %1135 = vmatpush.msra.mxu0 %v963
        %1136 = vmatpush.msra.mxu0 %v959
        %1137 = vmatmul.f32.gmra.mxu0 %v1059
        %v1138 = vpop.f32.mrf.mxu0
        %v1139 = vadd.f32 0.0, %v1138
        %1140 = vdwg.mxu0
        %v1145 = vrot.slane %v1099, 7
        %v1146 = vrot.slane %v1119, 6
        %v1147 = vrot.slane %v1139, 5
        %vm1148 = vcmask 1040384
        %v1149 = vsel %vm1148, %v1079, %v1145
        %vm1150 = vcmask 1042434
        %v1151 = vsel %vm1150, %v1146, %v1147
        %vm1152 = vcmask 1041408
        %v1153 = vsel %vm1152, %v1149, %v1151
        %v1155 = vsub.f32 %v1056, %v1153
        %v1156 = vperm.slane %v994, 0
        %v1157 = vperm.slane %v1014, 0
        %v1158 = vperm.slane %v1034, 0
        %v1159 = vperm.slane %v1054, 0
        %v1160 = vmul.f32 %v645, %v1156
        %v1161 = vmul.f32 %v646, %v1157
        %v1162 = vmul.f32 %v647, %v1158
        %v1163 = vmul.f32 %v648, %v1159
        %v1164 = vmul.f32 %v649, %v1156
        %v1165 = vmul.f32 %v650, %v1157
        %v1166 = vmul.f32 %v651, %v1158
        %v1167 = vmul.f32 %v652, %v1159
        %v1169 = vperm.slane %v1155, 0
        %v1170 = vperm.slane %v1155, 1
        %v1171 = vperm.slane %v1155, 2
        %v1172 = vperm.slane %v1155, 3
        %v1177 = vadd.f32 %v1160, %v1169
        %v1178 = vadd.f32 %v1161, %v1170
        %v1179 = vadd.f32 %v1162, %v1171
        %v1180 = vadd.f32 %v1163, %v1172
        %v1181 = vadd.f32 %v1164, %v1169
        %v1182 = vadd.f32 %v1165, %v1170
        %v1183 = vadd.f32 %v1166, %v1171
        %v1184 = vadd.f32 %v1167, %v1172
        %v1185 = vmax.f32 %v1177, 0.0
        %v1186 = vmax.f32 %v1178, 0.0
        %v1187 = vmax.f32 %v1179, 0.0
        %v1188 = vmax.f32 %v1180, 0.0
        %v1189 = vmax.f32 %v1181, 0.0
        %v1190 = vmax.f32 %v1182, 0.0
        %v1191 = vmax.f32 %v1183, 0.0
        %v1192 = vmax.f32 %v1184, 0.0
        %1193 = vst [vmem:[%s234] sm:$0xff] %v1185
        %1194 = vst [vmem:[%s234 + $0x8] sm:$0xff] %v1186
        %1195 = vst [vmem:[%s234 + $0x10] sm:$0xff] %v1187
        %1196 = vst [vmem:[%s234 + $0x18] sm:$0xff] %v1188
        %1197 = vst [vmem:[%s234 + $0x20] sm:$0xff] %v1189
        %1198 = vst [vmem:[%s234 + $0x28] sm:$0xff] %v1190
        %1199 = vst [vmem:[%s234 + $0x30] sm:$0xff] %v1191
        %1200 = vst [vmem:[%s234 + $0x38] sm:$0xff] %v1192
        %s1201 = sand.u32 %s138, 1
        %s1202 = scalar_lea.sflag [#allocation4], %s1201
        %s1203 = sand.u32 %s138, 1
        %s1204 = smul.addr %s1203, 64
        %s1205 = scalar_lea.vmem [#allocation5], %s1204
        // Predicated region
        $region45: #{tpu_custom_call.1} parent=39 // pred_check
          %p1206 = pneg %p148
        $region46: #{tpu_custom_call.1} parent=39 // pred_check_branch
          %1208 = sbr.rel (%p1206) target = $region48
        $region47: #{tpu_custom_call.1} parent=39 // pred_region
          %1210 = vsyncadd %s1202, 0
          %s1211 = smul.addr %s20, 8
          %s1212 = smul.addr %s1211, 8
          %s1213 = scalar_lea.hbm %s5, %s1212
          %s1214 = sshll.u32 %s1205, 4
          %s1215 = int_to_ptr.vmem [resolvable:$true] %s1214
          %s1216 = sshll.u32 %s1213, 4
          %s1217 = int_to_ptr.hbm [resolvable:$true] %s1216
          %1222 = dma.vmem_to_hbm [thread:$0]  %s1215, 1024, %s1217, %s1202, 512, 512, 32
        $region48: #{tpu_custom_call.1} parent=39 // pred_fallthru
          _
      $region40: #{tpu_custom_call.1} parent=5 // pred_fallthru
        _
      %p1223 = scmp.le.s32.totalorder 2, %s15
      // Predicated region
      $region49: #{tpu_custom_call.1} parent=5 // pred_check
        %p1224 = pneg %p1223
      $region50: #{tpu_custom_call.1} parent=5 // pred_check_branch
        %1226 = sbr.rel (%p1224) target = $region52
      $region51: #{tpu_custom_call.1} parent=5 // pred_region
        %s1227 = ssub.s32 %s15, 2
        // Predicated region
        $region53: #{tpu_custom_call.1} parent=51 // pred_check
          %p1228 = pneg %p154
        $region54: #{tpu_custom_call.1} parent=51 // pred_check_branch
          %1230 = sbr.rel (%p1228) target = $region56
        $region55: #{tpu_custom_call.1} parent=51 // pred_region
          %s1231 = sand.u32 %s139, 1
          %s1232 = scalar_lea.sflag [#allocation4], %s1231
          %s1233 = sand.u32 %s139, 1
          %s1234 = smul.addr %s1233, 64
          %s1235 = scalar_lea.vmem [#allocation5], %s1234
          %1237 = dma.done %s1232, 1024
        $region56: #{tpu_custom_call.1} parent=51 // pred_fallthru
          _
      $region52: #{tpu_custom_call.1} parent=5 // pred_fallthru
        _
    $region6: #{tpu_custom_call.1} parent=1 // loop_footer
      %s19 = sadd.s32 1, %s15
    $region7: #{tpu_custom_call.1} parent=1 // loop_footer_branch
      %14 = sbr.rel target = $region3
    $region8: #{tpu_custom_call.1} parent=1 // loop_exit
      _
    %1238 = vsyncpa [#allocation3], 1
    %s1239 = scalar_lea.sflag [#allocation3], 1
    %1240 = vsyncpa %s1239, 1
    %1241 = vsyncpa [#allocation4], 1
    %s1242 = scalar_lea.sflag [#allocation4], 1
    %1243 = vsyncpa %s1242, 1

</llo_original>
